<compile_context>
chip_gen: v7x
topology: tpu7x:2x2x1
jax: 0.10.0
libtpu: 0.0.40
codegen_flags: <defaults>
</compile_context>

<pallas_src>
import functools

import jax
import jax.numpy as jnp
import numpy as np
from jax import lax
from jax.experimental import pallas as pl
from jax.experimental.pallas import tpu as pltpu


def _chamfer_kernel(gts_ref, preds_ref, out_ref,
                    g2_ref, yy_ref, dr_ref, dl_acc_ref, *,
                    cs, n_chunks, inv_dl, inv_dr):
    """Grid = (B, n_preds_tiles).  gts resident per batch; preds streamed.

    Scratch:
      g2_ref  (D, Ng) f32   2 * gts, hoisted per batch (MXU RHS)
      yy_ref  (1, Ng) f32   ||gts||^2 per gts point, hoisted per batch
      dr_ref  (1, Ng) f32   running min over preds for each gts point
      dl_acc  (1, 1)  f32   running sum of per-pred mins for this batch
    """
    t = pl.program_id(1)
    n_t = pl.num_programs(1)

    # Per-batch init (t is the inner "arbitrary" axis -> fires once per batch).
    @pl.when(t == 0)
    def _init():
        g = gts_ref[0].astype(jnp.float32)                    # (D, Ng)
        g2_ref[...] = g + g                                   # fold the "2 *"
        yy_ref[...] = jnp.sum(g * g, axis=0, keepdims=True)   # (1, Ng)
        dr_ref[...] = jnp.full(dr_ref.shape, jnp.inf, dr_ref.dtype)
        dl_acc_ref[...] = jnp.zeros(dl_acc_ref.shape, dl_acc_ref.dtype)

    x = preds_ref[0].astype(jnp.float32)                      # (Ty, D)
    xx = jnp.sum(x * x, axis=-1, keepdims=True)               # (Ty, 1)

    def _chunk(g2_c, yy_c):
        # z[j, i] = 2 * preds_j . gts_i for this gts chunk.
        z = lax.dot_general(x, g2_c, (((1,), (0,)), ((), ())),
                            preferred_element_type=jnp.float32)   # (Ty, cs)
        p = (xx - z) + yy_c                                        # (Ty, cs)
        return (jnp.min(p, axis=-1, keepdims=True),   # (Ty, 1): per-pred min
                jnp.min(p, axis=0, keepdims=True))    # (1, cs): per-gts min

    if n_chunks == 1:
        dl_min, dr_c = _chunk(g2_ref[...], yy_ref[...])
        dr_ref[...] = jnp.minimum(dr_ref[...], dr_c)
    else:
        def body(c, dl_run):
            off = pl.multiple_of(c * cs, cs)
            dl_c, dr_c = _chunk(g2_ref[:, pl.ds(off, cs)],
                                yy_ref[:, pl.ds(off, cs)])
            dr_ref[:, pl.ds(off, cs)] = jnp.minimum(
                dr_ref[:, pl.ds(off, cs)], dr_c)
            return jnp.minimum(dl_run, dl_c)

        dl_min = lax.fori_loop(0, n_chunks, body,
                               jnp.full(xx.shape, jnp.inf, jnp.float32),
                               unroll=(n_chunks <= 8))

    # dl contribution of this preds tile (each pred is in exactly one tile).
    dl_acc_ref[...] += jnp.sum(dl_min, axis=0, keepdims=True)  # (1, 1)

    # Finalize this batch: scale by the two means' divisors and emit the
    # per-batch partial loss, broadcast across the 128-lane output block.
    @pl.when(t == n_t - 1)
    def _finalize():
        dr_sum = jnp.sum(dr_ref[...], axis=-1, keepdims=True)  # (1, 1)
        total = dl_acc_ref[...] * inv_dl + dr_sum * inv_dr     # (1, 1)
        out_ref[0] = jnp.broadcast_to(total, (1, 128))


def _pick_preds_rows(n_preds, max_rows=256):
    """Largest multiple-of-8 divisor of n_preds that is <= max_rows (sublane
    rows of the streamed preds block); falls back to the full axis."""
    if n_preds <= max_rows:
        return n_preds
    r = max_rows - max_rows % 8
    while r >= 8:
        if n_preds % r == 0:
            return r
        r -= 8
    return n_preds


def _pick_gts_chunk(n_gts, max_cols=128):
    """Largest multiple-of-128 divisor of n_gts that is <= max_cols (lane width
    of the fused inner chunk); falls back to a single full-width chunk."""
    if n_gts <= max_cols or n_gts % 128 != 0:
        return n_gts
    c = max_cols - max_cols % 128
    while c >= 128:
        if n_gts % c == 0:
            return c
        c -= 128
    return n_gts


def chamfer_loss(preds, gts, *, ty=None, cs=None):
    """preds: (B, Np, D), gts: (B, Ng, D). Returns scalar float32 loss."""
    B, Np, D = preds.shape
    Bg, Ng, Dg = gts.shape
    assert B == Bg and D == Dg, "ChamferLoss: batch / coord dims must match"

    ty = _pick_preds_rows(Np) if ty is None else ty
    cs = _pick_gts_chunk(Ng) if cs is None else cs
    assert Np % ty == 0, "preds tile must divide Np"
    assert Ng % cs == 0, "gts chunk must divide Ng"
    n_t = Np // ty
    n_chunks = Ng // cs

    # Only the *small* gts array is transposed (lane-dense MXU RHS); the large
    # preds array streams in its original layout (review #3).
    gts_t = jnp.swapaxes(gts, 1, 2)                 # (B, D, Ng)

    kernel = functools.partial(
        _chamfer_kernel, cs=cs, n_chunks=n_chunks,
        inv_dl=1.0 / (B * Np),   # divisor for dl.mean()  (dl has B*Np entries)
        inv_dr=1.0 / (B * Ng),   # divisor for dr.mean()  (dr has B*Ng entries)
    )

    out = pl.pallas_call(
        kernel,
        out_shape=jax.ShapeDtypeStruct((B, 1, 128), jnp.float32),
        grid_spec=pltpu.PrefetchScalarGridSpec(
            num_scalar_prefetch=0,
            grid=(B, n_t),
            in_specs=[
                # gts: same block for every preds tile -> fetched once per batch.
                pl.BlockSpec((1, D, Ng), lambda b, t: (b, 0, 0)),
                # preds: (ty, D) tiles streamed along t, original layout.
                pl.BlockSpec((1, ty, D), lambda b, t: (b, t, 0)),
            ],
            # Distinct per-batch lane-dense output block -> batch axis "parallel".
            out_specs=pl.BlockSpec((1, 1, 128), lambda b, t: (b, 0, 0)),
            scratch_shapes=[
                pltpu.VMEM((D, Ng), jnp.float32),   # 2 * gts (hoisted per batch)
                pltpu.VMEM((1, Ng), jnp.float32),   # ||gts||^2 (hoisted per batch)
                pltpu.VMEM((1, Ng), jnp.float32),   # running dr min (lane-dense)
                pltpu.VMEM((1, 1), jnp.float32),    # dl partial-sum accumulator
            ],
        ),
        compiler_params=pltpu.CompilerParams(
            dimension_semantics=("parallel", "arbitrary")),
    )(gts_t, preds)

    # Per-batch partial losses are already scaled; sum them in plain JAX.
    return jnp.sum(out[:, 0, 0])


def chamfer_loss_ref(preds, gts):
    """Pure-JAX reference mirroring the PyTorch module exactly."""
    x, y = gts.astype(jnp.float32), preds.astype(jnp.float32)
    xx = jnp.sum(x * x, axis=-1)[:, :, None]      # (B, Ng, 1)
    yy = jnp.sum(y * y, axis=-1)[:, None, :]      # (B, 1, Np)
    zz = jnp.einsum("bnd,bmd->bnm", x, y)         # (B, Ng, Np)
    P = xx + yy - 2.0 * zz
    return P.min(axis=1).mean() + P.min(axis=2).mean()


if __name__ == "__main__":
    key = jax.random.PRNGKey(0)
    k1, k2, k3, k4, k5, k6 = jax.random.split(key, 6)

    # Case 1: small square clouds — single preds tile, single gts chunk.
    B, N, D = 2, 64, 3
    preds = jax.random.normal(k1, (B, N, D), dtype=jnp.float32)
    gts = jax.random.normal(k2, (B, N, D), dtype=jnp.float32)
    loss = jax.block_until_ready(chamfer_loss(preds, gts))
    ref = jax.block_until_ready(chamfer_loss_ref(preds, gts))
    np.testing.assert_allclose(np.asarray(loss), np.asarray(ref),
                               rtol=1e-4, atol=1e-5)

    # Case 2: Np != Ng, multi-tile preds axis (exercises the dl accumulator and
    # the dr running min across tiles) and a multi-chunk gts axis (exercises
    # the fused inner fori_loop with dynamic 128-lane slices).
    Np2, Ng2 = 512, 256
    preds2 = jax.random.normal(k3, (B, Np2, D), dtype=jnp.float32)
    gts2 = jax.random.normal(k4, (B, Ng2, D), dtype=jnp.float32)
    loss2 = jax.block_until_ready(chamfer_loss(preds2, gts2, ty=256, cs=128))
    ref2 = jax.block_until_ready(chamfer_loss_ref(preds2, gts2))
    np.testing.assert_allclose(np.asarray(loss2), np.asarray(ref2),
                               rtol=1e-4, atol=1e-5)

    # Case 3: non-128-aligned cloud sizes (full-dim blocks, masked reductions).
    Np3, Ng3 = 200, 96
    preds3 = jax.random.normal(k5, (B, Np3, D), dtype=jnp.float32)
    gts3 = jax.random.normal(k6, (B, Ng3, D), dtype=jnp.float32)
    loss3 = jax.block_until_ready(chamfer_loss(preds3, gts3))
    ref3 = jax.block_until_ready(chamfer_loss_ref(preds3, gts3))
    np.testing.assert_allclose(np.asarray(loss3), np.asarray(ref3),
                               rtol=1e-4, atol=1e-5)

    print("KERNEL_OK")
</pallas_src>

<mosaic_0001>
module attributes {stable_mosaic.version = 11 : i64} {
  func.func @_chamfer_kernel(%arg0: i32, %arg1: i32, %arg2: memref<1x3x64xf32, #tpu.memory_space<vmem>>, %arg3: memref<1x64x3xf32, #tpu.memory_space<vmem>>, %arg4: memref<1x1x128xf32, #tpu.memory_space<vmem>>, %arg5: memref<3x64xf32, #tpu.memory_space<vmem>>, %arg6: memref<1x64xf32, #tpu.memory_space<vmem>>, %arg7: memref<1x64xf32, #tpu.memory_space<vmem>>, %arg8: memref<1x1xf32, #tpu.memory_space<vmem>>) attributes {dimension_semantics = [#tpu.dimension_semantics<parallel>, #tpu.dimension_semantics<arbitrary>], iteration_bounds = array<i64: 2, 1>, scalar_prefetch = 0 : i64, scratch_operands = 4 : i64, tpu.core_type = #tpu.core_type<tc>, window_params = [{transform_indices = @transform_0, window_bounds = array<i64: 1, 3, 64>}, {transform_indices = @transform_1, window_bounds = array<i64: 1, 64, 3>}, {transform_indices = @transform_2, window_bounds = array<i64: 1, 1, 128>}]} {
    %c0_i32 = arith.constant 0 : i32
    %0 = arith.cmpi eq, %arg1, %c0_i32 : i32
    %1 = arith.extui %0 : i1 to i32
    %c0_i32_0 = arith.constant 0 : i32
    %2 = arith.cmpi ne, %1, %c0_i32_0 : i32
    scf.if %2 {
      %c0_21 = arith.constant 0 : index
      %c0_22 = arith.constant 0 : index
      %c0_23 = arith.constant 0 : index
      %30 = vector.load %arg2[%c0_21, %c0_22, %c0_23] : memref<1x3x64xf32, #tpu.memory_space<vmem>>, vector<1x3x64xf32>
      %31 = vector.shape_cast %30 : vector<1x3x64xf32> to vector<3x64xf32>
      %32 = arith.addf %31, %31 : vector<3x64xf32>
      %c0_24 = arith.constant 0 : index
      %c0_25 = arith.constant 0 : index
      %33 = vector.load %arg5[%c0_24, %c0_25] : memref<3x64xf32, #tpu.memory_space<vmem>>, vector<3x64xf32>
      tpu.vector_store %arg5[%c0_24, %c0_25], %32 {strides = array<i32>} : memref<3x64xf32, #tpu.memory_space<vmem>>, vector<3x64xf32>,
      %34 = arith.mulf %31, %31 : vector<3x64xf32>
      %cst_26 = arith.constant dense<0.000000e+00> : vector<64xf32>
      %35 = vector.multi_reduction <add>, %34, %cst_26 [0] : vector<3x64xf32> to vector<64xf32>
      %36 = vector.shape_cast %35 : vector<64xf32> to vector<1x64xf32>
      %c0_27 = arith.constant 0 : index
      %c0_28 = arith.constant 0 : index
      %37 = vector.load %arg6[%c0_27, %c0_28] : memref<1x64xf32, #tpu.memory_space<vmem>>, vector<1x64xf32>
      tpu.vector_store %arg6[%c0_27, %c0_28], %36 {strides = array<i32>} : memref<1x64xf32, #tpu.memory_space<vmem>>, vector<1x64xf32>,
      %cst_29 = arith.constant 0x7F800000 : f32
      %38 = vector.broadcast %cst_29 : f32 to vector<1x64xf32>
      %c0_30 = arith.constant 0 : index
      %c0_31 = arith.constant 0 : index
      %39 = vector.load %arg7[%c0_30, %c0_31] : memref<1x64xf32, #tpu.memory_space<vmem>>, vector<1x64xf32>
      tpu.vector_store %arg7[%c0_30, %c0_31], %38 {strides = array<i32>} : memref<1x64xf32, #tpu.memory_space<vmem>>, vector<1x64xf32>,
      %cst_32 = arith.constant 0.000000e+00 : f32
      %40 = vector.broadcast %cst_32 : f32 to vector<1x1xf32>
      %c0_33 = arith.constant 0 : index
      %c0_34 = arith.constant 0 : index
      %41 = vector.load %arg8[%c0_33, %c0_34] : memref<1x1xf32, #tpu.memory_space<vmem>>, vector<1x1xf32>
      tpu.vector_store %arg8[%c0_33, %c0_34], %40 {strides = array<i32>} : memref<1x1xf32, #tpu.memory_space<vmem>>, vector<1x1xf32>,
    } else {
    }
    %c0 = arith.constant 0 : index
    %c0_1 = arith.constant 0 : index
    %c0_2 = arith.constant 0 : index
    %3 = vector.load %arg3[%c0, %c0_1, %c0_2] : memref<1x64x3xf32, #tpu.memory_space<vmem>>, vector<1x64x3xf32>
    %4 = vector.shape_cast %3 : vector<1x64x3xf32> to vector<64x3xf32>
    %5 = arith.mulf %4, %4 : vector<64x3xf32>
    %cst = arith.constant dense<0.000000e+00> : vector<64xf32>
    %6 = vector.multi_reduction <add>, %5, %cst [1] : vector<64x3xf32> to vector<64xf32>
    %7 = vector.shape_cast %6 : vector<64xf32> to vector<64x1xf32>
    %c0_3 = arith.constant 0 : index
    %c0_4 = arith.constant 0 : index
    %8 = vector.load %arg5[%c0_3, %c0_4] : memref<3x64xf32, #tpu.memory_space<vmem>>, vector<3x64xf32>
    %c0_5 = arith.constant 0 : index
    %c0_6 = arith.constant 0 : index
    %9 = vector.load %arg6[%c0_5, %c0_6] : memref<1x64xf32, #tpu.memory_space<vmem>>, vector<1x64xf32>
    %cst_7 = arith.constant dense<0.000000e+00> : vector<64x64xf32>
    %10 = tpu.matmul %4, %8, %cst_7 {dimension_numbers = #tpu.dot_dimension_numbers<[1], [0], [0], [1], [0, 0, 1, 1], [], []>} : vector<64x3xf32>, vector<3x64xf32>, vector<64x64xf32> -> vector<64x64xf32>
    %11 = vector.broadcast %7 : vector<64x1xf32> to vector<64x64xf32>
    %12 = arith.subf %11, %10 : vector<64x64xf32>
    %13 = vector.broadcast %9 : vector<1x64xf32> to vector<64x64xf32>
    %14 = arith.addf %12, %13 : vector<64x64xf32>
    %cst_8 = arith.constant dense<0x7F800000> : vector<64xf32>
    %15 = vector.multi_reduction <minimumf>, %14, %cst_8 [1] : vector<64x64xf32> to vector<64xf32>
    %16 = vector.shape_cast %15 : vector<64xf32> to vector<64x1xf32>
    %cst_9 = arith.constant dense<0x7F800000> : vector<64xf32>
    %17 = vector.multi_reduction <minimumf>, %14, %cst_9 [0] : vector<64x64xf32> to vector<64xf32>
    %18 = vector.shape_cast %17 : vector<64xf32> to vector<1x64xf32>
    %c0_10 = arith.constant 0 : index
    %c0_11 = arith.constant 0 : index
    %19 = vector.load %arg7[%c0_10, %c0_11] : memref<1x64xf32, #tpu.memory_space<vmem>>, vector<1x64xf32>
    %20 = arith.minimumf %19, %18 : vector<1x64xf32>
    %c0_12 = arith.constant 0 : index
    %c0_13 = arith.constant 0 : index
    %21 = vector.load %arg7[%c0_12, %c0_13] : memref<1x64xf32, #tpu.memory_space<vmem>>, vector<1x64xf32>
    tpu.vector_store %arg7[%c0_12, %c0_13], %20 {strides = array<i32>} : memref<1x64xf32, #tpu.memory_space<vmem>>, vector<1x64xf32>,
    %c0_14 = arith.constant 0 : index
    %c0_15 = arith.constant 0 : index
    %22 = vector.load %arg8[%c0_14, %c0_15] : memref<1x1xf32, #tpu.memory_space<vmem>>, vector<1x1xf32>
    %cst_16 = arith.constant dense<0.000000e+00> : vector<1xf32>
    %23 = vector.multi_reduction <add>, %16, %cst_16 [0] : vector<64x1xf32> to vector<1xf32>
    %24 = vector.shape_cast %23 : vector<1xf32> to vector<1x1xf32>
    %25 = arith.addf %22, %24 : vector<1x1xf32>
    %c0_17 = arith.constant 0 : index
    %c0_18 = arith.constant 0 : index
    %26 = vector.load %arg8[%c0_17, %c0_18] : memref<1x1xf32, #tpu.memory_space<vmem>>, vector<1x1xf32>
    tpu.vector_store %arg8[%c0_17, %c0_18], %25 {strides = array<i32>} : memref<1x1xf32, #tpu.memory_space<vmem>>, vector<1x1xf32>,
    %c0_i32_19 = arith.constant 0 : i32
    %27 = arith.cmpi eq, %arg1, %c0_i32_19 : i32
    %28 = arith.extui %27 : i1 to i32
    %c0_i32_20 = arith.constant 0 : i32
    %29 = arith.cmpi ne, %28, %c0_i32_20 : i32
    scf.if %29 {
      %c0_21 = arith.constant 0 : index
      %c0_22 = arith.constant 0 : index
      %30 = vector.load %arg7[%c0_21, %c0_22] : memref<1x64xf32, #tpu.memory_space<vmem>>, vector<1x64xf32>
      %cst_23 = arith.constant dense<0.000000e+00> : vector<1xf32>
      %31 = vector.multi_reduction <add>, %30, %cst_23 [1] : vector<1x64xf32> to vector<1xf32>
      %32 = vector.shape_cast %31 : vector<1xf32> to vector<1x1xf32>
      %c0_24 = arith.constant 0 : index
      %c0_25 = arith.constant 0 : index
      %33 = vector.load %arg8[%c0_24, %c0_25] : memref<1x1xf32, #tpu.memory_space<vmem>>, vector<1x1xf32>
      %cst_26 = arith.constant 7.812500e-03 : f32
      %34 = vector.broadcast %cst_26 : f32 to vector<1x1xf32>
      %35 = arith.mulf %33, %34 : vector<1x1xf32>
      %cst_27 = arith.constant 7.812500e-03 : f32
      %36 = vector.broadcast %cst_27 : f32 to vector<1x1xf32>
      %37 = arith.mulf %32, %36 : vector<1x1xf32>
      %38 = arith.addf %35, %37 : vector<1x1xf32>
      %39 = vector.shape_cast %38 : vector<1x1xf32> to vector<1x1xf32>
      %40 = vector.broadcast %39 : vector<1x1xf32> to vector<1x128xf32>
      %c0_28 = arith.constant 0 : index
      %c0_29 = arith.constant 0 : index
      %c0_30 = arith.constant 0 : index
      %41 = vector.load %arg4[%c0_28, %c0_29, %c0_30] : memref<1x1x128xf32, #tpu.memory_space<vmem>>, vector<1x1x128xf32>
      %42 = vector.shape_cast %41 : vector<1x1x128xf32> to vector<1x128xf32>
      %43 = vector.shape_cast %40 : vector<1x128xf32> to vector<1x1x128xf32>
      tpu.vector_store %arg4[%c0_28, %c0_29, %c0_30], %43 {strides = array<i32>} : memref<1x1x128xf32, #tpu.memory_space<vmem>>, vector<1x1x128xf32>,
    } else {
    }
    return
  }
  func.func @transform_0(%arg0: i32, %arg1: i32) -> (i32, i32, i32) {
    %c0_i32 = arith.constant 0 : i32
    %c0_i32_0 = arith.constant 0 : i32
    %c0_i32_1 = arith.constant 0 : i32
    return %arg0, %c0_i32, %c0_i32_0 : i32, i32, i32
  }
  func.func @transform_1(%arg0: i32, %arg1: i32) -> (i32, i32, i32) {
    %c0_i32 = arith.constant 0 : i32
    %c0_i32_0 = arith.constant 0 : i32
    return %arg0, %arg1, %c0_i32 : i32, i32, i32
  }
  func.func @transform_2(%arg0: i32, %arg1: i32) -> (i32, i32, i32) {
    %c0_i32 = arith.constant 0 : i32
    %c0_i32_0 = arith.constant 0 : i32
    %c0_i32_1 = arith.constant 0 : i32
    return %arg0, %c0_i32, %c0_i32_0 : i32, i32, i32
  }
}

</mosaic_0001>

<llo_original>
// kernel: tpu_custom_call.1
$region0: #{tpu_custom_call.1}
  #allocation0 [shape = 'u32[]', space=smem, size = 0x4, offset = 0x4, fixed_abs, tag = 'smem constant byte address 0x4 - core index']
  #allocation1 [shape = 'u32[144,128]{1,0:T(1,128)}', space=vmem, size = 0x12000, scoped, tag = 'internal scratch']
  #allocation2 [shape = 'f32[3,64]{1,0:T(4,128)}', space=vmem, size = 0x800, scoped, tag = 'scratch operand']
  #allocation3 [shape = 'f32[1,64]{1,0:T(1,128)}', space=vmem, size = 0x200, scoped, tag = 'scratch operand']
  #allocation4 [shape = 'f32[1,64]{1,0:T(1,128)}', space=vmem, size = 0x200, scoped, tag = 'scratch operand']
  #allocation5 [shape = 'f32[1,1]{1,0:T(1,128)}', space=vmem, size = 0x200, scoped, tag = 'scratch operand']
  %s0 = inlined_call_operand.vmem [shape: f32[2,3,64], index: 0, kind: input, shape index: {}]
  %s1 = inlined_call_operand.vmem [shape: f32[2,64,3], index: 1, kind: input, shape index: {}]
  %s2 = inlined_call_operand.hbm [shape: f32[2,1,128], index: 2, kind: output, shape index: {}]
  %s3 = sld [smem:[#allocation0]]
  $region49: #{tpu_custom_call.1} parent=0
    _
  %s5 = ssub.s32 1, %s3
  %s6 = scalar_select 0, %s5, %s3
  $region1: #{tpu_custom_call.1} parent=0
    #allocation6 [shape = 'u8[1024]{0}', space=vmem, size = 0x400, scoped, tag = 'output window, operand 0']
    #allocation7 [shape = 's32[2]{0}', space=sflag, size = 0x8, scoped, tag = 'scoped memory for tpu_custom_call.1']
    %7 = vsyncpa [#allocation7], 0
    %s8 = scalar_lea.sflag [#allocation7], 1
    %9 = vsyncpa %s8, 0
    loop: start=0, step=1, limit=4
    $region2: #{tpu_custom_call.1} parent=1 // loop_pre_header
      _
    $region3: #{tpu_custom_call.1} parent=1 // loop_header
      %s11 = sphi 0, %s15
      %p12 = scmp.ge.s32.totalorder %s11, 4
      %s18 = sphi 0, %s30
      %s19 = sphi 0, %s26
      %s20 = sphi 0, %s18
      %s21 = sphi 0, %s19
      %s22 = sphi 0, %s20
      %s23 = sphi 0, %s21
      %s33 = sphi 0, %s35
      %s36 = sphi 0, %s33
      %s37 = sphi 0, %s36
      %s53 = sphi 0, %s37
      %s61 = sphi 0, %s63
      %s64 = sphi 0, %s61
      %s65 = sphi 0, %s64
      %s81 = sphi 0, %s65
      %s87 = sphi 0, %s89
      %s90 = sphi 0, %s87
      %s91 = sphi 0, %s90
      %s107 = sphi 0, %s91
    $region4: #{tpu_custom_call.1} parent=1 // loop_header_branch
      %14 = sbr.rel (%p12) target = $region8
    $region5: #{tpu_custom_call.1} parent=1 // loop_body
      %s16 = ssub.s32 %s11, 1
      %s17 = ssub.s32 %s11, 2
      %s24 = sadd.s32 1, %s19
      %p25 = scmp.ge.s32.totalorder %s24, 1
      %s26 = scalar_select %p25, 0, %s24
      %s27 = sadd.s32 1, %s18
      %s28 = scalar_select %p25, %s27, %s18
      %p29 = scmp.ge.s32.totalorder %s28, 2
      %s30 = scalar_select %p29, 0, %s28
      %s31 = ssub.s32 %s18, %s30
      %p32 = scmp.eq.s32.totalorder %s31, 0
      %s34 = sadd.s32 %s33, 1
      %s35 = scalar_select %p32, %s33, %s34
      %p38 = pneg %p32
      %p39 = scmp.eq.s32.totalorder %s11, 1
      %p40 = por %p38, %p39
      %p41 = scmp.ne.s32.totalorder %s33, %s36
      %p42 = scmp.eq.s32.totalorder %s11, 0
      %p43 = por %p41, %p42
      %p44 = scmp.ne.s32.totalorder %s33, %s36
      %p45 = scmp.eq.s32.totalorder %s16, 1
      %p46 = por %p44, %p45
      %p47 = scmp.ne.s32.totalorder %s36, %s37
      %p48 = scmp.eq.s32.totalorder %s16, 0
      %p49 = por %p47, %p48
      %p50 = scmp.ne.s32.totalorder %s36, %s37
      %p51 = scmp.eq.s32.totalorder %s17, 1
      %p52 = por %p50, %p51
      %p54 = scmp.ne.s32.totalorder %s37, %s53
      %p55 = scmp.eq.s32.totalorder %s17, 0
      %p56 = por %p54, %p55
      %s57 = ssub.s32 %s18, %s30
      %s58 = ssub.s32 %s19, %s26
      %s59 = sor.u32 %s57, %s58
      %p60 = scmp.eq.s32.totalorder %s59, 0
      %s62 = sadd.s32 %s61, 1
      %s63 = scalar_select %p60, %s61, %s62
      %p66 = pneg %p60
      %p67 = scmp.eq.s32.totalorder %s11, 1
      %p68 = por %p66, %p67
      %p69 = scmp.ne.s32.totalorder %s61, %s64
      %p70 = scmp.eq.s32.totalorder %s11, 0
      %p71 = por %p69, %p70
      %p72 = scmp.ne.s32.totalorder %s61, %s64
      %p73 = scmp.eq.s32.totalorder %s16, 1
      %p74 = por %p72, %p73
      %p75 = scmp.ne.s32.totalorder %s64, %s65
      %p76 = scmp.eq.s32.totalorder %s16, 0
      %p77 = por %p75, %p76
      %p78 = scmp.ne.s32.totalorder %s64, %s65
      %p79 = scmp.eq.s32.totalorder %s17, 1
      %p80 = por %p78, %p79
      %p82 = scmp.ne.s32.totalorder %s65, %s81
      %p83 = scmp.eq.s32.totalorder %s17, 0
      %p84 = por %p82, %p83
      %s85 = ssub.s32 %s18, %s30
      %p86 = scmp.eq.s32.totalorder %s85, 0
      %s88 = sadd.s32 %s87, 1
      %s89 = scalar_select %p86, %s87, %s88
      %p92 = pneg %p86
      %p93 = scmp.eq.s32.totalorder %s11, 1
      %p94 = por %p92, %p93
      %p95 = scmp.ne.s32.totalorder %s87, %s90
      %p96 = scmp.eq.s32.totalorder %s11, 0
      %p97 = por %p95, %p96
      %p98 = scmp.ne.s32.totalorder %s87, %s90
      %p99 = scmp.eq.s32.totalorder %s16, 1
      %p100 = por %p98, %p99
      %p101 = scmp.ne.s32.totalorder %s90, %s91
      %p102 = scmp.eq.s32.totalorder %s16, 0
      %p103 = por %p101, %p102
      %p104 = scmp.ne.s32.totalorder %s90, %s91
      %p105 = scmp.eq.s32.totalorder %s17, 1
      %p106 = por %p104, %p105
      %p108 = scmp.ne.s32.totalorder %s91, %s107
      %p109 = scmp.eq.s32.totalorder %s17, 0
      %p110 = por %p108, %p109
      %p111 = scmp.le.s32.totalorder 1, %s11
      %p112 = scmp.lt.s32.totalorder %s11, 3
      %p113 = pnand %p111, %p112
      %p114 = pneg %p113
      // Predicated region
      $region9: #{tpu_custom_call.1} parent=5 // pred_check
        _
      $region10: #{tpu_custom_call.1} parent=5 // pred_check_branch
        %116 = sbr.rel (%p113) target = $region12
      $region11: #{tpu_custom_call.1} parent=5 // pred_region
        %s117 = ssub.s32 %s11, 1
      $region12: #{tpu_custom_call.1} parent=5 // pred_fallthru
        _
      %p118 = scmp.lt.s32.totalorder %s11, 2
      // Predicated region
      $region13: #{tpu_custom_call.1} parent=5 // pred_check
        %p119 = pneg %p118
      $region14: #{tpu_custom_call.1} parent=5 // pred_check_branch
        %121 = sbr.rel (%p119) target = $region16
      $region15: #{tpu_custom_call.1} parent=5 // pred_region
        // Predicated region
        $region17: #{tpu_custom_call.1} parent=15 // pred_check
          %p122 = pneg %p43
        $region18: #{tpu_custom_call.1} parent=15 // pred_check_branch
          %124 = sbr.rel (%p122) target = $region20
        $region19: #{tpu_custom_call.1} parent=15 // pred_region
          %p125 = scmp.lt.s32.totalorder %s18, 1
          %s126 = scalar_select %p125, %s18, 1
          %s127 = smul.addr %s126, 4
          %s128 = scalar_lea.vmem %s0, %s127
        $region20: #{tpu_custom_call.1} parent=15 // pred_fallthru
          _
        // Predicated region
        $region21: #{tpu_custom_call.1} parent=15 // pred_check
          %p129 = pneg %p71
        $region22: #{tpu_custom_call.1} parent=15 // pred_check_branch
          %131 = sbr.rel (%p129) target = $region24
        $region23: #{tpu_custom_call.1} parent=15 // pred_region
          %s132 = smul.u32 8, %s19
          %p133 = scmp.lt.s32.totalorder %s18, 1
          %s134 = scalar_select %p133, %s18, 1
          %p135 = scmp.lt.s32.totalorder %s132, 7
          %s136 = scalar_select %p135, %s132, 7
          %s137 = smul.addr %s134, 8
          %s138 = sadd.s32 %s136, %s137
          %s139 = smul.addr %s138, 8
          %s140 = scalar_lea.vmem %s1, %s139
          %s141 = smul.u32 8, %s19
        $region24: #{tpu_custom_call.1} parent=15 // pred_fallthru
          _
      $region16: #{tpu_custom_call.1} parent=5 // pred_fallthru
        _
      %p142 = scmp.le.s32.totalorder 1, %s11
      %p143 = scmp.lt.s32.totalorder %s11, 3
      %p144 = pnand %p142, %p143
      %p145 = pneg %p144
      // Predicated region
      $region25: #{tpu_custom_call.1} parent=5 // pred_check
        _
      $region26: #{tpu_custom_call.1} parent=5 // pred_check_branch
        %147 = sbr.rel (%p144) target = $region28
      $region27: #{tpu_custom_call.1} parent=5 // pred_region
        %s148 = ssub.s32 %s11, 1
        %p149 = scmp.lt.s32.totalorder %s20, 1
        %s150 = scalar_select %p149, %s20, 1
        %s151 = smul.addr %s150, 4
        %s152 = scalar_lea.vmem %s0, %s151
        %p153 = pneg %p49
        %p154 = pneg %p46
        %s155 = smul.u32 8, %s21
        %p156 = scmp.lt.s32.totalorder %s20, 1
        %s157 = scalar_select %p156, %s20, 1
        %p158 = scmp.lt.s32.totalorder %s155, 7
        %s159 = scalar_select %p158, %s155, 7
        %s160 = smul.addr %s157, 8
        %s161 = sadd.s32 %s159, %s160
        %s162 = smul.addr %s161, 8
        %s163 = scalar_lea.vmem %s1, %s162
        %p164 = pneg %p77
        %p165 = pneg %p74
        %p166 = pneg %p103
        %p167 = pneg %p100
        %s168 = sand.u32 %s90, 1
        %s169 = scalar_lea.sflag [#allocation7], %s168
        %s170 = sand.u32 %s90, 1
        %s171 = scalar_lea.vmem [#allocation6], %s170
        %p172 = scmp.lt.s32.totalorder %s20, 1
        %s173 = scalar_select %p172, %s20, 1
        %s174 = smul.addr %s173, 4
        %s175 = scalar_lea.vmem %s0, %s174
        %s176 = smul.u32 8, %s21
        %p177 = scmp.lt.s32.totalorder %s20, 1
        %s178 = scalar_select %p177, %s20, 1
        %p179 = scmp.lt.s32.totalorder %s176, 7
        %s180 = scalar_select %p179, %s176, 7
        %s181 = smul.addr %s178, 8
        %s182 = sadd.s32 %s180, %s181
        %s183 = smul.addr %s182, 8
        %s184 = scalar_lea.vmem %s1, %s183
        %s185 = smul.u32 8, %s21
        %p186 = scmp.eq.s32.totalorder %s21, 0
        // Predicated region
        $region29: #{tpu_custom_call.1} parent=27 // pred_check
          %p187 = pneg %p186
        $region30: #{tpu_custom_call.1} parent=27 // pred_check_branch
          %189 = sbr.rel (%p187) target = $region32
        $region31: #{tpu_custom_call.1} parent=27 // pred_region
          %v190 = vld [vmem:[%s175] sm:$0x7]
          %v191 = vadd.f32 %v190, %v190
          %vm192 = vcmask 518144
          %193 = vst.msk [vmem:[#allocation2] sm:$0x7] %vm192, %v191
          %v194 = vmul.f32 %v190, %v190
          %v195 = vsel %vm192, %v194, 0.0
          %v196 = vrot.slane %v195, 4
          %v197 = vadd.f32 %v195, %v196
          %v198 = vrot.slane %v197, 2
          %v199 = vadd.f32 %v197, %v198
          %v200 = vrot.slane %v199, 1
          %v201 = vadd.f32 %v199, %v200
          %vm202 = vcmask 516096
          %203 = vst.msk [vmem:[#allocation3] sm:$0x1] %vm202, %v201
          %204 = vst.msk [vmem:[#allocation4] sm:$0x1] %vm202, inf
          %vm205 = vcmask 0
          %206 = vst.msk [vmem:[#allocation5] sm:$0x1] %vm205, 0.0
        $region32: #{tpu_custom_call.1} parent=27 // pred_fallthru
          _
        %v207 = vld [vmem:[%s184] sm:$0xff]
        %v208 = vld [vmem:[%s184 + $0x8] sm:$0xff]
        %v209 = vld [vmem:[%s184 + $0x10] sm:$0xff]
        %v210 = vld [vmem:[%s184 + $0x18] sm:$0xff]
        %v211 = vld [vmem:[%s184 + $0x20] sm:$0xff]
        %v212 = vld [vmem:[%s184 + $0x28] sm:$0xff]
        %v213 = vld [vmem:[%s184 + $0x30] sm:$0xff]
        %v214 = vld [vmem:[%s184 + $0x38] sm:$0xff]
        %v215 = vmul.f32 %v207, %v207
        %v216 = vmul.f32 %v208, %v208
        %v217 = vmul.f32 %v209, %v209
        %v218 = vmul.f32 %v210, %v210
        %v219 = vmul.f32 %v211, %v211
        %v220 = vmul.f32 %v212, %v212
        %v221 = vmul.f32 %v213, %v213
        %v222 = vmul.f32 %v214, %v214
        %vm223 = vcmask 23552
        %v224 = vsel %vm223, %v215, 0.0
        %225 = vadd.xlane.f32.xlu0 %v224
        %v226 = vpop.xlane.xlu0 %225
        %v227 = vsel %vm223, %v216, 0.0
        %228 = vadd.xlane.f32.xlu0 %v227
        %v229 = vpop.xlane.xlu0 %228
        %v230 = vsel %vm223, %v217, 0.0
        %231 = vadd.xlane.f32.xlu0 %v230
        %v232 = vpop.xlane.xlu0 %231
        %v233 = vsel %vm223, %v218, 0.0
        %234 = vadd.xlane.f32.xlu0 %v233
        %v235 = vpop.xlane.xlu0 %234
        %v236 = vsel %vm223, %v219, 0.0
        %237 = vadd.xlane.f32.xlu0 %v236
        %v238 = vpop.xlane.xlu0 %237
        %v239 = vsel %vm223, %v220, 0.0
        %240 = vadd.xlane.f32.xlu0 %v239
        %v241 = vpop.xlane.xlu0 %240
        %v242 = vsel %vm223, %v221, 0.0
        %243 = vadd.xlane.f32.xlu0 %v242
        %v244 = vpop.xlane.xlu0 %243
        %v245 = vsel %vm223, %v222, 0.0
        %246 = vadd.xlane.f32.xlu0 %v245
        %v247 = vpop.xlane.xlu0 %246
        %v248 = vld [vmem:[#allocation2] sm:$0x7]
        %v249 = vld [vmem:[#allocation3] sm:$0x1]
        %v251 = vsel %vm223, %v207, 0
        %v254 = vsel %vm223, %v208, 0
        %v257 = vsel %vm223, %v209, 0
        %v260 = vsel %vm223, %v210, 0
        %v263 = vsel %vm223, %v211, 0
        %v266 = vsel %vm223, %v212, 0
        %v269 = vsel %vm223, %v213, 0
        %v272 = vsel %vm223, %v214, 0
        %vm274 = vcmask 1042432
        %v276 = vsel %vm274, %v248, 0
        %278 = vmatprep.subr.mxu0 0.0
        %279 = vmatpush1.msra.mxu0 %v276
        %280 = vmatprep.subr.mxu0 0.0
        %281 = vmatpush1.msra.mxu0 0.0
        %282 = vmatprep.subr.mxu0 0.0
        %283 = vmatpush1.msra.mxu0 0.0
        %284 = vmatprep.subr.mxu0 0.0
        %285 = vmatpush1.msra.mxu0 0.0
        %286 = vmatprep.subr.mxu0 0.0
        %287 = vmatpush1.msra.mxu0 0.0
        %288 = vmatprep.subr.mxu0 0.0
        %289 = vmatpush1.msra.mxu0 0.0
        %290 = vmatprep.subr.mxu0 0.0
        %291 = vmatpush1.msra.mxu0 0.0
        %292 = vmatprep.subr.mxu0 0.0
        %293 = vmatpush1.msra.mxu0 0.0
        %294 = vmatprep.subr.mxu0 0.0
        %295 = vmatpush1.msra.mxu0 0.0
        %296 = vmatprep.subr.mxu0 0.0
        %297 = vmatpush1.msra.mxu0 0.0
        %298 = vmatprep.subr.mxu0 0.0
        %299 = vmatpush1.msra.mxu0 0.0
        %300 = vmatprep.subr.mxu0 0.0
        %301 = vmatpush1.msra.mxu0 0.0
        %302 = vmatprep.subr.mxu0 0.0
        %303 = vmatpush1.msra.mxu0 0.0
        %304 = vmatprep.subr.mxu0 0.0
        %305 = vmatpush1.msra.mxu0 0.0
        %306 = vmatprep.subr.mxu0 0.0
        %307 = vmatpush1.msra.mxu0 0.0
        %308 = vmatprep.subr.mxu0 0.0
        %309 = vmatpush1.msra.mxu0 0.0
        %310 = vmatprep.subr.mxu0 0.0
        %311 = vmatpush1.msra.mxu0 0.0
        %312 = vmatprep.subr.mxu0 0.0
        %313 = vmatpush1.msra.mxu0 0.0
        %314 = vmatprep.subr.mxu0 0.0
        %315 = vmatpush1.msra.mxu0 0.0
        %316 = vmatprep.subr.mxu0 0.0
        %317 = vmatpush1.msra.mxu0 0.0
        %318 = vmatprep.subr.mxu0 0.0
        %319 = vmatpush1.msra.mxu0 0.0
        %320 = vmatprep.subr.mxu0 0.0
        %321 = vmatpush1.msra.mxu0 0.0
        %322 = vmatprep.subr.mxu0 0.0
        %323 = vmatpush1.msra.mxu0 0.0
        %324 = vmatprep.subr.mxu0 0.0
        %325 = vmatpush1.msra.mxu0 0.0
        %326 = vmatprep.subr.mxu0 0.0
        %327 = vmatpush1.msra.mxu0 0.0
        %328 = vmatprep.subr.mxu0 0.0
        %329 = vmatpush1.msra.mxu0 0.0
        %330 = vmatprep.subr.mxu0 0.0
        %331 = vmatpush1.msra.mxu0 0.0
        %332 = vmatprep.subr.mxu0 0.0
        %333 = vmatpush1.msra.mxu0 0.0
        %334 = vmatprep.subr.mxu0 0.0
        %335 = vmatpush1.msra.mxu0 0.0
        %336 = vmatprep.subr.mxu0 0.0
        %337 = vmatpush1.msra.mxu0 0.0
        %338 = vmatprep.subr.mxu0 0.0
        %339 = vmatpush1.msra.mxu0 0.0
        %340 = vmatprep.subr.mxu0 0.0
        %341 = vmatpush1.msra.mxu0 0.0
        %342 = vmatprep.mubr.f32.mxu0 0.0
        %343 = vmatmul.mubr.f32.gmra.mrb[0].mxu0 %v251
        %v344 = vpop.f32.mrb[0].mxu0
        %v345 = vadd.f32 0.0, %v344
        %v346 = vpop.f32.mrb[0].mxu0
        %347 = vmatprep.mubr.f32.mxu0 0.0
        %348 = vmatmul.mubr.f32.gmra.mrb[0].mxu0 %v254
        %v349 = vpop.f32.mrb[0].mxu0
        %v350 = vadd.f32 0.0, %v349
        %v351 = vpop.f32.mrb[0].mxu0
        %352 = vmatprep.mubr.f32.mxu0 0.0
        %353 = vmatmul.mubr.f32.gmra.mrb[0].mxu0 %v257
        %v354 = vpop.f32.mrb[0].mxu0
        %v355 = vadd.f32 0.0, %v354
        %v356 = vpop.f32.mrb[0].mxu0
        %357 = vmatprep.mubr.f32.mxu0 0.0
        %358 = vmatmul.mubr.f32.gmra.mrb[0].mxu0 %v260
        %v359 = vpop.f32.mrb[0].mxu0
        %v360 = vadd.f32 0.0, %v359
        %v361 = vpop.f32.mrb[0].mxu0
        %362 = vmatprep.mubr.f32.mxu0 0.0
        %363 = vmatmul.mubr.f32.gmra.mrb[0].mxu0 %v263
        %v364 = vpop.f32.mrb[0].mxu0
        %v365 = vadd.f32 0.0, %v364
        %v366 = vpop.f32.mrb[0].mxu0
        %367 = vmatprep.mubr.f32.mxu0 0.0
        %368 = vmatmul.mubr.f32.gmra.mrb[0].mxu0 %v266
        %v369 = vpop.f32.mrb[0].mxu0
        %v370 = vadd.f32 0.0, %v369
        %v371 = vpop.f32.mrb[0].mxu0
        %372 = vmatprep.mubr.f32.mxu0 0.0
        %373 = vmatmul.mubr.f32.gmra.mrb[0].mxu0 %v269
        %v374 = vpop.f32.mrb[0].mxu0
        %v375 = vadd.f32 0.0, %v374
        %v376 = vpop.f32.mrb[0].mxu0
        %377 = vmatprep.mubr.f32.mxu0 0.0
        %378 = vmatmul.mubr.f32.gmra.mrb[0].mxu0 %v272
        %v379 = vpop.f32.mrb[0].mxu0
        %v380 = vadd.f32 0.0, %v379
        %v381 = vpop.f32.mrb[0].mxu0
        %382 = vdwg.mxu0
        %v383 = vsub.f32 %v226, %v345
        %v384 = vsub.f32 %v229, %v350
        %v385 = vsub.f32 %v232, %v355
        %v386 = vsub.f32 %v235, %v360
        %v387 = vsub.f32 %v238, %v365
        %v388 = vsub.f32 %v241, %v370
        %v389 = vsub.f32 %v244, %v375
        %v390 = vsub.f32 %v247, %v380
        %v392 = vlaneseq
        %v393 = vshrl.u32 %v392, 7
        %v394 = vsub.s32 0, %v393
        %v395 = vrot.slane %v249, %v394
        %v397 = vadd.f32 %v383, %v395
        %v398 = vadd.f32 %v384, %v395
        %v399 = vadd.f32 %v385, %v395
        %v400 = vadd.f32 %v386, %v395
        %v401 = vadd.f32 %v387, %v395
        %v402 = vadd.f32 %v388, %v395
        %v403 = vadd.f32 %v389, %v395
        %v404 = vadd.f32 %v390, %v395
        %vm405 = vcmask 523264
        %v406 = vsel %vm405, %v397, inf
        %407 = vmin.xlane.f32.xlu0 %v406
        %v408 = vpop.xlane.xlu0 %407
        %v409 = vsel %vm405, %v398, inf
        %410 = vmin.xlane.f32.xlu0 %v409
        %v411 = vpop.xlane.xlu0 %410
        %v412 = vsel %vm405, %v399, inf
        %413 = vmin.xlane.f32.xlu0 %v412
        %v414 = vpop.xlane.xlu0 %413
        %v415 = vsel %vm405, %v400, inf
        %416 = vmin.xlane.f32.xlu0 %v415
        %v417 = vpop.xlane.xlu0 %416
        %v418 = vsel %vm405, %v401, inf
        %419 = vmin.xlane.f32.xlu0 %v418
        %v420 = vpop.xlane.xlu0 %419
        %v421 = vsel %vm405, %v402, inf
        %422 = vmin.xlane.f32.xlu0 %v421
        %v423 = vpop.xlane.xlu0 %422
        %v424 = vsel %vm405, %v403, inf
        %425 = vmin.xlane.f32.xlu0 %v424
        %v426 = vpop.xlane.xlu0 %425
        %v427 = vsel %vm405, %v404, inf
        %428 = vmin.xlane.f32.xlu0 %v427
        %v429 = vpop.xlane.xlu0 %428
        %v430 = vmin.f32 %v406, %v418
        %v431 = vmin.f32 %v409, %v421
        %v432 = vmin.f32 %v412, %v424
        %v433 = vmin.f32 %v415, %v427
        %v434 = vmin.f32 %v430, %v431
        %v435 = vmin.f32 %v432, %v433
        %v436 = vmin.f32 %v434, %v435
        %v437 = vrot.slane %v436, 4
        %v438 = vmin.f32 %v436, %v437
        %v439 = vrot.slane %v438, 2
        %v440 = vmin.f32 %v438, %v439
        %v441 = vrot.slane %v440, 1
        %v442 = vmin.f32 %v440, %v441
        %v443 = vld [vmem:[#allocation4] sm:$0x1]
        %v444 = vmin.f32 %v443, %v442
        %vm445 = vcmask 516096
        %446 = vst.msk [vmem:[#allocation4] sm:$0x1] %vm445, %v444
        %v447 = vld [vmem:[#allocation5] sm:$0x1]
        %v448 = vadd.f32 %v408, %v411
        %v449 = vadd.f32 %v448, %v414
        %v450 = vadd.f32 %v449, %v417
        %v451 = vadd.f32 %v450, %v420
        %v452 = vadd.f32 %v451, %v423
        %v453 = vadd.f32 %v452, %v426
        %v454 = vadd.f32 %v453, %v429
        %v455 = vrot.slane %v454, 4
        %v456 = vadd.f32 %v454, %v455
        %v457 = vrot.slane %v456, 2
        %v458 = vadd.f32 %v456, %v457
        %v459 = vrot.slane %v458, 1
        %v460 = vadd.f32 %v458, %v459
        %v461 = vadd.f32 %v447, %v460
        %vm462 = vcmask 0
        %463 = vst.msk [vmem:[#allocation5] sm:$0x1] %vm462, %v461
        // Predicated region
        $region33: #{tpu_custom_call.1} parent=27 // pred_check
          %p464 = pneg %p186
        $region34: #{tpu_custom_call.1} parent=27 // pred_check_branch
          %466 = sbr.rel (%p464) target = $region36
        $region35: #{tpu_custom_call.1} parent=27 // pred_region
          %v467 = vld [vmem:[#allocation4] sm:$0x1]
          %v468 = vsel %vm445, %v467, 0.0
          %469 = vadd.xlane.f32.xlu0 %v468
          %v470 = vpop.xlane.xlu0 %469
          %v471 = vld [vmem:[#allocation5] sm:$0x1]
          %v472 = vmul.f32 %v471, 0.0078125
          %v473 = vmul.f32 %v470, 0.0078125
          %v474 = vadd.f32 %v472, %v473
          %476 = vset.pattern.permute.xlu0 0
          %477 = vperm.xlu0 %476, %v474
          %v478 = vpop.permute.xlu0 %477
          %v480 = vlaneseq
          %v481 = vshrl.u32 %v480, 7
          %v482 = vsub.s32 0, %v481
          %v483 = vrot.slane %v478, %v482
          %484 = vst [vmem:[%s171] sm:$0x1] %v483
        $region36: #{tpu_custom_call.1} parent=27 // pred_fallthru
          _
        %s485 = sand.u32 %s90, 1
        %s486 = scalar_lea.sflag [#allocation7], %s485
        %s487 = sand.u32 %s90, 1
        %s488 = scalar_lea.vmem [#allocation6], %s487
        // Predicated region
        $region37: #{tpu_custom_call.1} parent=27 // pred_check
          %p489 = pneg %p100
        $region38: #{tpu_custom_call.1} parent=27 // pred_check_branch
          %491 = sbr.rel (%p489) target = $region40
        $region39: #{tpu_custom_call.1} parent=27 // pred_region
          %s493 = ssub.s32 16, 16
          %494 = vsyncadd %s486, %s493
          %s495 = smul.addr %s20, 16
          %s496 = scalar_lea.hbm %s2, %s495
          %s498 = sshll.u32 %s488, 4
          %s499 = int_to_ptr.vmem [resolvable:$true] %s498
          %501 = dma.vmem_to_hbm [thread:$0]  %s499, 16, %s496, %s486
        $region40: #{tpu_custom_call.1} parent=27 // pred_fallthru
          _
      $region28: #{tpu_custom_call.1} parent=5 // pred_fallthru
        _
      %p502 = scmp.le.s32.totalorder 2, %s11
      // Predicated region
      $region41: #{tpu_custom_call.1} parent=5 // pred_check
        %p503 = pneg %p502
      $region42: #{tpu_custom_call.1} parent=5 // pred_check_branch
        %505 = sbr.rel (%p503) target = $region44
      $region43: #{tpu_custom_call.1} parent=5 // pred_region
        %s506 = ssub.s32 %s11, 2
        // Predicated region
        $region45: #{tpu_custom_call.1} parent=43 // pred_check
          %p507 = pneg %p106
        $region46: #{tpu_custom_call.1} parent=43 // pred_check_branch
          %509 = sbr.rel (%p507) target = $region48
        $region47: #{tpu_custom_call.1} parent=43 // pred_region
          %s510 = sand.u32 %s91, 1
          %s511 = scalar_lea.sflag [#allocation7], %s510
          %s512 = sand.u32 %s91, 1
          %s513 = scalar_lea.vmem [#allocation6], %s512
          %514 = dma.done %s511, 16
        $region48: #{tpu_custom_call.1} parent=43 // pred_fallthru
          _
      $region44: #{tpu_custom_call.1} parent=5 // pred_fallthru
        _
    $region6: #{tpu_custom_call.1} parent=1 // loop_footer
      %s15 = sadd.s32 1, %s11
    $region7: #{tpu_custom_call.1} parent=1 // loop_footer_branch
      %10 = sbr.rel target = $region3
    $region8: #{tpu_custom_call.1} parent=1 // loop_exit
      _
    %515 = vsyncpa [#allocation7], 1
    %s516 = scalar_lea.sflag [#allocation7], 1
    %517 = vsyncpa %s516, 1

</llo_original>
